<compile_context>
chip_gen: v5e
topology: v5e:2x2
jax: 0.10.0
libtpu: 0.0.40
codegen_flags: <defaults>
</compile_context>

<pallas_src>
import jax
import jax.numpy as jnp
import numpy as np
from jax.experimental import pallas as pl
from jax.experimental.pallas import tpu as pltpu


_NEG_BIG = -1e30  # finite additive mask (avoids inf-inf NaNs in log-softmax)


def _round_up(x, m):
    return (x + m - 1) // m * m


def _vmem_capacity_bytes(default=64 * 1024 * 1024):
    """Physical VMEM per TensorCore (v5e/v6e: 128 MiB, v7x: 64 MiB)."""
    try:
        info_fn = getattr(pltpu, "get_tpu_info", None)
        if info_fn is None:
            return default
        return int(getattr(info_fn(), "vmem_capacity_bytes", default))
    except Exception:
        return default


def _choose_batch_tile(batch, s_pad, seq_len, e, max_fs, f_pad, l_pad,
                       emb_bytes, param_bytes, vmem_budget):
    """Pick the largest batch tile that fits the per-core VMEM budget."""
    # Grid-invariant operands (double-buffered by the pipeline).
    const = 2 * ((max_fs * e * f_pad + f_pad * l_pad) * param_bytes
                 + (seq_len * f_pad + l_pad) * 4)
    # Per-batch-row cost: double-buffered emb block + f32 intermediates.
    per_row = (2 * s_pad * e * emb_bytes           # streamed embedding block (x2 buf)
               + seq_len * max_fs * e * emb_bytes  # unfolded window
               + seq_len * f_pad * 4               # conv accumulator (f32)
               + 4 * l_pad * 4)                    # logits / head temporaries
    tile = (vmem_budget - const) // max(per_row, 1)
    tile = int(max(8, min(tile, 1024)))
    tile = (tile // 8) * 8
    if tile >= batch:
        return batch
    return max(8, tile)


def _make_kernel(seq_len, max_fs):
    """Kernel body. Per grid step:
         emb_ref : (B_t, S + max_fs - 1, E)  embeddings, seq zero-padded
         wc_ref  : (max_fs * E, F_pad)       packed conv weights (zero-padded)
         bt_ref  : (S, F_pad) f32            conv bias + (-1e30) time-validity mask
         wl_ref  : (F_pad, L_pad)            packed classifier weight
         hb_ref  : (1, L_pad) f32            classifier bias + (-1e30) lane mask
         out_ref : (B_t, L_pad) f32          log-probs (padded lanes discarded)
    """

    def kernel(emb_ref, wc_ref, bt_ref, wl_ref, hb_ref, out_ref):
        b_t = emb_ref.shape[0]
        e = emb_ref.shape[2]
        f_pad = wc_ref.shape[1]

        # Unfolded sliding windows -> one lane-dense (B_t*S, max_fs*E) operand,
        # so the whole conv bank is a single MXU matmul with K = max_fs*E.
        cols = [
            emb_ref[:, dt:dt + seq_len, :].reshape(b_t * seq_len, e)
            for dt in range(max_fs)
        ]
        x_unf = jnp.concatenate(cols, axis=-1)                     # (B_t*S, max_fs*E)

        acc = jnp.dot(x_unf, wc_ref[...],
                      preferred_element_type=jnp.float32)          # (B_t*S, F_pad) f32
        acc = acc.reshape(b_t, seq_len, f_pad) + bt_ref[...]       # +bias, mask bad t

        pooled = jnp.max(acc, axis=1)                              # max over time
        feats = jnp.maximum(pooled, 0.0)                           # ReLU (monotone, so
                                                                   # max/ReLU commute)

        logits = jnp.dot(feats.astype(wl_ref.dtype), wl_ref[...],
                         preferred_element_type=jnp.float32) + hb_ref[...]

        # LogSoftmax over the masked, 128-padded class lanes.
        m = jnp.max(logits, axis=1, keepdims=True)
        lse = jnp.log(jnp.sum(jnp.exp(logits - m), axis=1, keepdims=True)) + m
        out_ref[...] = (logits - lse).astype(out_ref.dtype)

    return kernel


def cnn_classifier_forward(token_ids, emb_table, conv_ws, conv_bs, lin_w, lin_b):
    """Fused TextCNN forward. Returns log-probs (B, label_size) float32.

    conv_ws[i]: (fs_i, E, F_i)  (PyTorch Conv2d weight (F,1,fs,E) transposed)
    conv_bs[i]: (1, F_i);  lin_w: (sum F_i, L);  lin_b: (1, L)
    The matmul dtype follows emb_table.dtype (pass bf16 to halve DMA/VMEM).
    """
    batch, seq_len = token_ids.shape
    e = emb_table.shape[1]
    l = lin_b.shape[-1]
    filter_sizes = tuple(int(w.shape[0]) for w in conv_ws)
    num_filters = tuple(int(w.shape[2]) for w in conv_ws)
    total_f = sum(num_filters)
    max_fs = max(filter_sizes)
    s_pad = seq_len + max_fs - 1
    f_pad = _round_up(total_f, 128)
    l_pad = _round_up(l, 128)
    dtype = emb_table.dtype
    emb_bytes = jnp.dtype(dtype).itemsize

    # ---- lane-dense parameter packing (one-time plain-JAX glue) -------------
    wc = jnp.zeros((max_fs, e, f_pad), jnp.float32)
    b_packed = jnp.zeros((f_pad,), jnp.float32)
    limits = np.full((f_pad,), seq_len, np.int32)        # position t valid iff t < limit
    col = 0
    for w, b, fs_i, f_i in zip(conv_ws, conv_bs, filter_sizes, num_filters):
        wc = wc.at[:fs_i, :, col:col + f_i].set(w.astype(jnp.float32))
        b_packed = b_packed.at[col:col + f_i].set(b.reshape(-1).astype(jnp.float32))
        limits[col:col + f_i] = seq_len - fs_i + 1
        col += f_i
    wc = wc.reshape(max_fs * e, f_pad).astype(dtype)

    t_mask = np.where(np.arange(seq_len)[:, None] < limits[None, :], 0.0, _NEG_BIG)
    bias_time = jnp.asarray(t_mask, dtype=jnp.float32) + b_packed[None, :]  # (S, F_pad)

    wl = jnp.zeros((f_pad, l_pad), jnp.float32)
    wl = wl.at[:total_f, :l].set(lin_w.astype(jnp.float32)).astype(dtype)
    head_bias = jnp.full((1, l_pad), _NEG_BIG, jnp.float32)
    head_bias = head_bias.at[:, :l].set(lin_b.reshape(1, l).astype(jnp.float32))

    # ---- embedding lookup (glue; see TODO above) -----------------------------
    emb = jnp.take(emb_table, token_ids, axis=0).astype(dtype)              # (B, S, E)

    # ---- generation-aware batch tiling ---------------------------------------
    vmem_cap = _vmem_capacity_bytes()
    vmem_limit = int(min(vmem_cap // 2, 64 * 1024 * 1024))
    b_tile = _choose_batch_tile(batch, s_pad, seq_len, e, max_fs, f_pad, l_pad,
                                emb_bytes, emb_bytes, vmem_limit // 2)
    b_padded = _round_up(batch, b_tile)

    emb = jnp.pad(emb, ((0, b_padded - batch), (0, max_fs - 1), (0, 0)))    # (B_pad, S_pad, E)

    kernel = _make_kernel(seq_len, max_fs)
    out = pl.pallas_call(
        kernel,
        out_shape=jax.ShapeDtypeStruct((b_padded, l_pad), jnp.float32),
        grid=(b_padded // b_tile,),
        in_specs=[
            pl.BlockSpec((b_tile, s_pad, e), lambda i: (i, 0, 0)),       # streamed emb
            pl.BlockSpec((max_fs * e, f_pad), lambda i: (0, 0)),         # resident weights
            pl.BlockSpec((seq_len, f_pad), lambda i: (0, 0)),
            pl.BlockSpec((f_pad, l_pad), lambda i: (0, 0)),
            pl.BlockSpec((1, l_pad), lambda i: (0, 0)),
        ],
        out_specs=pl.BlockSpec((b_tile, l_pad), lambda i: (i, 0)),
        compiler_params=pltpu.CompilerParams(
            dimension_semantics=("parallel",),       # megacore batch split on v7x
            vmem_limit_bytes=vmem_limit,
        ),
    )(emb, wc, bias_time, wl, head_bias)

    return out[:batch, :l]


def _reference_forward(token_ids, emb_table, conv_ws, conv_bs, lin_w, lin_b):
    """Pure-JAX reference mirroring the PyTorch module (eval mode)."""
    emb = emb_table[token_ids].astype(jnp.float32)     # (B, S, E)
    s = emb.shape[1]
    feats = []
    for w, b in zip(conv_ws, conv_bs):
        fs = w.shape[0]
        t_out = s - fs + 1
        acc = 0.0
        for dt in range(fs):
            acc = acc + jnp.einsum("bte,ef->btf", emb[:, dt:dt + t_out, :],
                                   w[dt].astype(jnp.float32))
        fm = jax.nn.relu(acc + b[None, :, :].astype(jnp.float32))
        feats.append(jnp.max(fm, axis=1))
    features = jnp.concatenate(feats, axis=1)
    logits = features @ lin_w + lin_b
    return jax.nn.log_softmax(logits, axis=1)


if __name__ == "__main__":
    # Small, module-consistent shapes.
    vocab_size = 50
    label_size = 5
    embedding_dim = 32
    filter_mapping = {3: 8, 4: 8}      # filter_size -> num_filters
    B, S = 2, 16

    key = jax.random.PRNGKey(0)
    keys = jax.random.split(key, 8)

    token_ids = jax.random.randint(keys[0], (B, S), 0, vocab_size, dtype=jnp.int32)
    emb_table = jax.random.normal(keys[1], (vocab_size, embedding_dim), jnp.float32)

    conv_ws, conv_bs = [], []
    for i, (fs, nf) in enumerate(filter_mapping.items()):
        conv_ws.append(0.1 * jax.random.normal(keys[2 + i], (fs, embedding_dim, nf), jnp.float32))
        conv_bs.append(0.05 * jax.random.normal(keys[4 + i], (1, nf), jnp.float32))

    total_filters = sum(filter_mapping.values())
    lin_w = 0.1 * jax.random.normal(keys[6], (total_filters, label_size), jnp.float32)
    lin_b = 0.05 * jax.random.normal(keys[7], (1, label_size), jnp.float32)

    ref = _reference_forward(token_ids, emb_table, conv_ws, conv_bs, lin_w, lin_b)

    # f32 path: tight match against the reference.
    out = cnn_classifier_forward(token_ids, emb_table, conv_ws, conv_bs, lin_w, lin_b)
    out = jax.block_until_ready(out)
    assert out.shape == (B, label_size)
    assert jnp.allclose(out, ref, atol=1e-4, rtol=1e-4), "f32 Pallas output mismatch vs reference"

    # bf16 streaming path (halves emb DMA/VMEM; f32 accumulation on the MXU).
    out_bf16 = cnn_classifier_forward(token_ids, emb_table.astype(jnp.bfloat16),
                                      conv_ws, conv_bs, lin_w, lin_b)
    out_bf16 = jax.block_until_ready(out_bf16)
    assert out_bf16.shape == (B, label_size)
    assert jnp.allclose(out_bf16, ref, atol=5e-2, rtol=5e-2), "bf16 Pallas output mismatch vs reference"

    print("KERNEL_OK")
</pallas_src>

<mosaic_0001>
module attributes {stable_mosaic.version = 11 : i64} {
  func.func @kernel(%arg0: i32, %arg1: memref<2x19x32xf32, #tpu.memory_space<vmem>>, %arg2: memref<128x128xf32, #tpu.memory_space<vmem>>, %arg3: memref<16x128xf32, #tpu.memory_space<vmem>>, %arg4: memref<128x128xf32, #tpu.memory_space<vmem>>, %arg5: memref<1x128xf32, #tpu.memory_space<vmem>>, %arg6: memref<2x128xf32, #tpu.memory_space<vmem>>) attributes {dimension_semantics = [#tpu.dimension_semantics<parallel>], iteration_bounds = array<i64: 1>, scalar_prefetch = 0 : i64, scratch_operands = 0 : i64, tpu.core_type = #tpu.core_type<tc>, window_params = [{transform_indices = @transform_0, window_bounds = array<i64: 2, 19, 32>}, {pipeline_mode = #tpu.pipeline_mode<synchronous>, transform_indices = @transform_1, window_bounds = array<i64: 128, 128>}, {pipeline_mode = #tpu.pipeline_mode<synchronous>, transform_indices = @transform_2, window_bounds = array<i64: 16, 128>}, {pipeline_mode = #tpu.pipeline_mode<synchronous>, transform_indices = @transform_3, window_bounds = array<i64: 128, 128>}, {pipeline_mode = #tpu.pipeline_mode<synchronous>, transform_indices = @transform_4, window_bounds = array<i64: 1, 128>}, {transform_indices = @transform_5, window_bounds = array<i64: 2, 128>}]} {
    %c0 = arith.constant 0 : index
    %c0_0 = arith.constant 0 : index
    %c0_1 = arith.constant 0 : index
    %0 = vector.load %arg1[%c0, %c0_0, %c0_1] : memref<2x19x32xf32, #tpu.memory_space<vmem>>, vector<2x16x32xf32>
    %1 = vector.shape_cast %0 : vector<2x16x32xf32> to vector<32x32xf32>
    %c0_2 = arith.constant 0 : index
    %c1 = arith.constant 1 : index
    %c0_3 = arith.constant 0 : index
    %2 = vector.load %arg1[%c0_2, %c1, %c0_3] : memref<2x19x32xf32, #tpu.memory_space<vmem>>, vector<2x16x32xf32>
    %3 = vector.shape_cast %2 : vector<2x16x32xf32> to vector<32x32xf32>
    %c0_4 = arith.constant 0 : index
    %c2 = arith.constant 2 : index
    %c0_5 = arith.constant 0 : index
    %4 = vector.load %arg1[%c0_4, %c2, %c0_5] : memref<2x19x32xf32, #tpu.memory_space<vmem>>, vector<2x16x32xf32>
    %5 = vector.shape_cast %4 : vector<2x16x32xf32> to vector<32x32xf32>
    %c0_6 = arith.constant 0 : index
    %c3 = arith.constant 3 : index
    %c0_7 = arith.constant 0 : index
    %6 = vector.load %arg1[%c0_6, %c3, %c0_7] : memref<2x19x32xf32, #tpu.memory_space<vmem>>, vector<2x16x32xf32>
    %7 = vector.shape_cast %6 : vector<2x16x32xf32> to vector<32x32xf32>
    %8 = tpu.concatenate %1, %3, %5, %7 in 1 : vector<32x32xf32>, vector<32x32xf32>, vector<32x32xf32>, vector<32x32xf32> -> vector<32x128xf32>
    %c0_8 = arith.constant 0 : index
    %c0_9 = arith.constant 0 : index
    %9 = vector.load %arg2[%c0_8, %c0_9] : memref<128x128xf32, #tpu.memory_space<vmem>>, vector<128x128xf32>
    %cst = arith.constant dense<0.000000e+00> : vector<32x128xf32>
    %10 = tpu.matmul %8, %9, %cst {dimension_numbers = #tpu.dot_dimension_numbers<[1], [0], [0], [1], [0, 0, 1, 1], [], []>} : vector<32x128xf32>, vector<128x128xf32>, vector<32x128xf32> -> vector<32x128xf32>
    %11 = vector.shape_cast %10 : vector<32x128xf32> to vector<2x16x128xf32>
    %c0_10 = arith.constant 0 : index
    %c0_11 = arith.constant 0 : index
    %12 = vector.load %arg3[%c0_10, %c0_11] : memref<16x128xf32, #tpu.memory_space<vmem>>, vector<16x128xf32>
    %13 = vector.shape_cast %12 : vector<16x128xf32> to vector<1x16x128xf32>
    %14 = vector.broadcast %13 : vector<1x16x128xf32> to vector<2x16x128xf32>
    %15 = arith.addf %11, %14 : vector<2x16x128xf32>
    %cst_12 = arith.constant dense<0xFF800000> : vector<2x128xf32>
    %16 = vector.multi_reduction <maximumf>, %15, %cst_12 [1] : vector<2x16x128xf32> to vector<2x128xf32>
    %cst_13 = arith.constant 0.000000e+00 : f32
    %17 = vector.broadcast %cst_13 : f32 to vector<2x128xf32>
    %18 = arith.maximumf %16, %17 : vector<2x128xf32>
    %c0_14 = arith.constant 0 : index
    %c0_15 = arith.constant 0 : index
    %19 = vector.load %arg4[%c0_14, %c0_15] : memref<128x128xf32, #tpu.memory_space<vmem>>, vector<128x128xf32>
    %cst_16 = arith.constant dense<0.000000e+00> : vector<2x128xf32>
    %20 = tpu.matmul %18, %19, %cst_16 {dimension_numbers = #tpu.dot_dimension_numbers<[1], [0], [0], [1], [0, 0, 1, 1], [], []>} : vector<2x128xf32>, vector<128x128xf32>, vector<2x128xf32> -> vector<2x128xf32>
    %c0_17 = arith.constant 0 : index
    %c0_18 = arith.constant 0 : index
    %21 = vector.load %arg5[%c0_17, %c0_18] : memref<1x128xf32, #tpu.memory_space<vmem>>, vector<1x128xf32>
    %22 = vector.broadcast %21 : vector<1x128xf32> to vector<2x128xf32>
    %23 = arith.addf %20, %22 : vector<2x128xf32>
    %cst_19 = arith.constant dense<0xFF800000> : vector<2xf32>
    %24 = vector.multi_reduction <maximumf>, %23, %cst_19 [1] : vector<2x128xf32> to vector<2xf32>
    %25 = vector.shape_cast %24 : vector<2xf32> to vector<2x1xf32>
    %26 = vector.broadcast %25 : vector<2x1xf32> to vector<2x128xf32>
    %27 = arith.subf %23, %26 : vector<2x128xf32>
    %28 = math.exp %27 : vector<2x128xf32>
    %cst_20 = arith.constant dense<0.000000e+00> : vector<2xf32>
    %29 = vector.multi_reduction <add>, %28, %cst_20 [1] : vector<2x128xf32> to vector<2xf32>
    %30 = vector.shape_cast %29 : vector<2xf32> to vector<2x1xf32>
    %31 = math.log %30 : vector<2x1xf32>
    %32 = arith.addf %31, %25 : vector<2x1xf32>
    %33 = vector.broadcast %32 : vector<2x1xf32> to vector<2x128xf32>
    %34 = arith.subf %23, %33 : vector<2x128xf32>
    %c0_21 = arith.constant 0 : index
    %c0_22 = arith.constant 0 : index
    %35 = vector.load %arg6[%c0_21, %c0_22] : memref<2x128xf32, #tpu.memory_space<vmem>>, vector<2x128xf32>
    tpu.vector_store %arg6[%c0_21, %c0_22], %34 {strides = array<i32>} : memref<2x128xf32, #tpu.memory_space<vmem>>, vector<2x128xf32>,
    return
  }
  func.func @transform_0(%arg0: i32) -> (i32, i32, i32) {
    %c0_i32 = arith.constant 0 : i32
    %c0_i32_0 = arith.constant 0 : i32
    %c0_i32_1 = arith.constant 0 : i32
    return %arg0, %c0_i32, %c0_i32_0 : i32, i32, i32
  }
  func.func @transform_1(%arg0: i32) -> (i32, i32) {
    %c0_i32 = arith.constant 0 : i32
    %c0_i32_0 = arith.constant 0 : i32
    %c0_i32_1 = arith.constant 0 : i32
    return %c0_i32, %c0_i32_0 : i32, i32
  }
  func.func @transform_2(%arg0: i32) -> (i32, i32) {
    %c0_i32 = arith.constant 0 : i32
    %c0_i32_0 = arith.constant 0 : i32
    %c0_i32_1 = arith.constant 0 : i32
    return %c0_i32, %c0_i32_0 : i32, i32
  }
  func.func @transform_3(%arg0: i32) -> (i32, i32) {
    %c0_i32 = arith.constant 0 : i32
    %c0_i32_0 = arith.constant 0 : i32
    %c0_i32_1 = arith.constant 0 : i32
    return %c0_i32, %c0_i32_0 : i32, i32
  }
  func.func @transform_4(%arg0: i32) -> (i32, i32) {
    %c0_i32 = arith.constant 0 : i32
    %c0_i32_0 = arith.constant 0 : i32
    %c0_i32_1 = arith.constant 0 : i32
    return %c0_i32, %c0_i32_0 : i32, i32
  }
  func.func @transform_5(%arg0: i32) -> (i32, i32) {
    %c0_i32 = arith.constant 0 : i32
    %c0_i32_0 = arith.constant 0 : i32
    return %arg0, %c0_i32 : i32, i32
  }
}

</mosaic_0001>

<llo_original>
// kernel: tpu_custom_call.1
$region0: #{tpu_custom_call.1}
  #allocation0 [shape = 'u32[]', space=smem, size = 0x4, offset = 0x4, fixed_abs, tag = 'smem constant byte address 0x4 - core index']
  #allocation1 [shape = 'u32[72,128]{1,0:T(1,128)}', space=vmem, size = 0x9000, scoped, tag = 'internal scratch']
  %s0 = inlined_call_operand.vmem [shape: f32[2,19,32], index: 0, kind: input, shape index: {}]
  %s1 = inlined_call_operand.hbm [shape: f32[128,128], index: 1, kind: input, shape index: {}]
  %s2 = inlined_call_operand.vmem [shape: f32[16,128], index: 2, kind: input, shape index: {}]
  %s3 = inlined_call_operand.hbm [shape: f32[128,128], index: 3, kind: input, shape index: {}]
  %s4 = inlined_call_operand.vmem [shape: f32[1,128], index: 4, kind: input, shape index: {}]
  %s5 = inlined_call_operand.hbm [shape: f32[2,128], index: 5, kind: output, shape index: {}]
  %s6 = sld [smem:[#allocation0]]
  $region38: #{tpu_custom_call.1} parent=0
    _
  %s8 = ssub.s32 1, %s6
  %s9 = scalar_select 0, %s8, %s6
  $region1: #{tpu_custom_call.1} parent=0
    #allocation2 [shape = 'u8[65536]{0}', space=vmem, size = 0x10000, scoped, tag = 'input window, operand 1, single buffered']
    #allocation3 [shape = 's32[1]{0}', space=sflag, size = 0x4, scoped, tag = 'scoped memory for tpu_custom_call.1']
    #allocation4 [shape = 's32[1]{0}', space=sflag, size = 0x4, scoped, tag = 'scoped memory for tpu_custom_call.1']
    #allocation5 [shape = 'u8[65536]{0}', space=vmem, size = 0x10000, scoped, tag = 'input window, operand 3, single buffered']
    #allocation6 [shape = 's32[1]{0}', space=sflag, size = 0x4, scoped, tag = 'scoped memory for tpu_custom_call.1']
    #allocation7 [shape = 'u8[1024]{0}', space=vmem, size = 0x400, scoped, tag = 'output window, operand 0, single buffered']
    %10 = vsyncpa [#allocation3], 0
    %11 = vsyncpa [#allocation6], 0
    %12 = vsyncpa [#allocation4], 0
    // Predicated region
    $region2: #{tpu_custom_call.1} parent=1 // pred_check
      _
    $region3: #{tpu_custom_call.1} parent=1 // pred_check_branch
      %14 = sbr.rel (0) target = $region5
    $region4: #{tpu_custom_call.1} parent=1 // pred_region
      _
    $region5: #{tpu_custom_call.1} parent=1 // pred_fallthru
      _
    // Predicated region
    $region6: #{tpu_custom_call.1} parent=1 // pred_check
      _
    $region7: #{tpu_custom_call.1} parent=1 // pred_check_branch
      %16 = sbr.rel (0) target = $region9
    $region8: #{tpu_custom_call.1} parent=1 // pred_region
      %18 = vsyncadd [#allocation3], 0
      %s19 = sshll.u32 %s1, 4
      %s20 = int_to_ptr.hbm [resolvable:$true] %s19
      %s21 = sshll.u32 [#allocation2], 4
      %s22 = int_to_ptr.vmem [resolvable:$true] %s21
      %27 = dma.hbm_to_vmem [thread:$0]  %s20, 2048, %s22, [#allocation3], 128, 128, 8
    $region9: #{tpu_custom_call.1} parent=1 // pred_fallthru
      _
    // Predicated region
    $region10: #{tpu_custom_call.1} parent=1 // pred_check
      _
    $region11: #{tpu_custom_call.1} parent=1 // pred_check_branch
      %29 = sbr.rel (0) target = $region13
    $region12: #{tpu_custom_call.1} parent=1 // pred_region
      _
    $region13: #{tpu_custom_call.1} parent=1 // pred_fallthru
      _
    // Predicated region
    $region14: #{tpu_custom_call.1} parent=1 // pred_check
      _
    $region15: #{tpu_custom_call.1} parent=1 // pred_check_branch
      %31 = sbr.rel (0) target = $region17
    $region16: #{tpu_custom_call.1} parent=1 // pred_region
      %33 = vsyncadd [#allocation6], 0
      %s34 = sshll.u32 %s3, 4
      %s35 = int_to_ptr.hbm [resolvable:$true] %s34
      %s36 = sshll.u32 [#allocation5], 4
      %s37 = int_to_ptr.vmem [resolvable:$true] %s36
      %42 = dma.hbm_to_vmem [thread:$0]  %s35, 2048, %s37, [#allocation6], 128, 128, 8
    $region17: #{tpu_custom_call.1} parent=1 // pred_fallthru
      _
    // Predicated region
    $region18: #{tpu_custom_call.1} parent=1 // pred_check
      _
    $region19: #{tpu_custom_call.1} parent=1 // pred_check_branch
      %44 = sbr.rel (0) target = $region21
    $region20: #{tpu_custom_call.1} parent=1 // pred_region
      _
    $region21: #{tpu_custom_call.1} parent=1 // pred_fallthru
      _
    // Predicated region
    $region22: #{tpu_custom_call.1} parent=1 // pred_check
      _
    $region23: #{tpu_custom_call.1} parent=1 // pred_check_branch
      %46 = sbr.rel (0) target = $region25
    $region24: #{tpu_custom_call.1} parent=1 // pred_region
      %48 = dma.done [#allocation3], 2048
    $region25: #{tpu_custom_call.1} parent=1 // pred_fallthru
      _
    // Predicated region
    $region26: #{tpu_custom_call.1} parent=1 // pred_check
      _
    $region27: #{tpu_custom_call.1} parent=1 // pred_check_branch
      %50 = sbr.rel (0) target = $region29
    $region28: #{tpu_custom_call.1} parent=1 // pred_region
      %52 = dma.done [#allocation6], 2048
    $region29: #{tpu_custom_call.1} parent=1 // pred_fallthru
      _
    %v53 = vld [vmem:[%s0] sm:$0xff]
    %v54 = vld [vmem:[%s0 + $0x8] sm:$0xff]
    %v55 = vld [vmem:[%s0 + $0x18] sm:$0xff]
    %v56 = vld [vmem:[%s0 + $0x20] sm:$0xff]
    %v57 = vld [vmem:[%s0 + $0x1] sm:$0xff]
    %v58 = vld [vmem:[%s0 + $0x9] sm:$0xff]
    %v59 = vld [vmem:[%s0 + $0x19] sm:$0xff]
    %v60 = vld [vmem:[%s0 + $0x21] sm:$0xff]
    %v61 = vld [vmem:[%s0 + $0x2] sm:$0xff]
    %v62 = vld [vmem:[%s0 + $0xa] sm:$0xff]
    %v63 = vld [vmem:[%s0 + $0x1a] sm:$0xff]
    %v64 = vld [vmem:[%s0 + $0x22] sm:$0xff]
    %v65 = vld [vmem:[%s0 + $0x3] sm:$0xff]
    %v66 = vld [vmem:[%s0 + $0xb] sm:$0xff]
    %v67 = vld [vmem:[%s0 + $0x1b] sm:$0xff]
    %v68 = vld [vmem:[%s0 + $0x23] sm:$0xff]
    %73 = vrot.lane.b32.xlu0 %v57, 32
    %v74 = vpop.permute.xlu0 %73
    %75 = vrot.lane.b32.xlu0 %v58, 32
    %v76 = vpop.permute.xlu0 %75
    %77 = vrot.lane.b32.xlu0 %v59, 32
    %v78 = vpop.permute.xlu0 %77
    %79 = vrot.lane.b32.xlu0 %v60, 32
    %v80 = vpop.permute.xlu0 %79
    %89 = vrot.lane.b32.xlu0 %v61, 64
    %v90 = vpop.permute.xlu0 %89
    %91 = vrot.lane.b32.xlu0 %v62, 64
    %v92 = vpop.permute.xlu0 %91
    %93 = vrot.lane.b32.xlu0 %v63, 64
    %v94 = vpop.permute.xlu0 %93
    %95 = vrot.lane.b32.xlu0 %v64, 64
    %v96 = vpop.permute.xlu0 %95
    %105 = vrot.lane.b32.xlu0 %v65, 96
    %v106 = vpop.permute.xlu0 %105
    %107 = vrot.lane.b32.xlu0 %v66, 96
    %v108 = vpop.permute.xlu0 %107
    %109 = vrot.lane.b32.xlu0 %v67, 96
    %v110 = vpop.permute.xlu0 %109
    %111 = vrot.lane.b32.xlu0 %v68, 96
    %v112 = vpop.permute.xlu0 %111
    %vm117 = vcmask 261120
    %v118 = vsel %vm117, %v53, %v74
    %v119 = vsel %vm117, %v54, %v76
    %v120 = vsel %vm117, %v55, %v78
    %v121 = vsel %vm117, %v56, %v80
    %vm122 = vcmask 523264
    %v123 = vsel %vm122, %v118, %v90
    %v124 = vsel %vm122, %v119, %v92
    %v125 = vsel %vm122, %v120, %v94
    %v126 = vsel %vm122, %v121, %v96
    %vm127 = vcmask 785408
    %v128 = vsel %vm127, %v123, %v106
    %v129 = vsel %vm127, %v124, %v108
    %v130 = vsel %vm127, %v125, %v110
    %v131 = vsel %vm127, %v126, %v112
    %v132 = vld [vmem:[#allocation2] sm:$0xff]
    %v133 = vld [vmem:[#allocation2 + $0x8] sm:$0xff]
    %v134 = vld [vmem:[#allocation2 + $0x10] sm:$0xff]
    %v135 = vld [vmem:[#allocation2 + $0x18] sm:$0xff]
    %v136 = vld [vmem:[#allocation2 + $0x20] sm:$0xff]
    %v137 = vld [vmem:[#allocation2 + $0x28] sm:$0xff]
    %v138 = vld [vmem:[#allocation2 + $0x30] sm:$0xff]
    %v139 = vld [vmem:[#allocation2 + $0x38] sm:$0xff]
    %v140 = vld [vmem:[#allocation2 + $0x40] sm:$0xff]
    %v141 = vld [vmem:[#allocation2 + $0x48] sm:$0xff]
    %v142 = vld [vmem:[#allocation2 + $0x50] sm:$0xff]
    %v143 = vld [vmem:[#allocation2 + $0x58] sm:$0xff]
    %v144 = vld [vmem:[#allocation2 + $0x60] sm:$0xff]
    %v145 = vld [vmem:[#allocation2 + $0x68] sm:$0xff]
    %v146 = vld [vmem:[#allocation2 + $0x70] sm:$0xff]
    %v147 = vld [vmem:[#allocation2 + $0x78] sm:$0xff]
    %148 = vmatpush.msra.mxu0 %v147
    %149 = vmatpush.msra.mxu0 %v146
    %150 = vmatpush.msra.mxu0 %v145
    %151 = vmatpush.msra.mxu0 %v144
    %152 = vmatpush.msra.mxu0 %v143
    %153 = vmatpush.msra.mxu0 %v142
    %154 = vmatpush.msra.mxu0 %v141
    %155 = vmatpush.msra.mxu0 %v140
    %156 = vmatpush.msra.mxu0 %v139
    %157 = vmatpush.msra.mxu0 %v138
    %158 = vmatpush.msra.mxu0 %v137
    %159 = vmatpush.msra.mxu0 %v136
    %160 = vmatpush.msra.mxu0 %v135
    %161 = vmatpush.msra.mxu0 %v134
    %162 = vmatpush.msra.mxu0 %v133
    %163 = vmatpush.msra.mxu0 %v132
    %164 = vmatmul.f32.gmra.mxu0 %v128
    %v165 = vpop.f32.mrf.mxu0
    %v166 = vadd.f32 0.0, %v165
    %167 = vmatmul.f32.gmra.mxu0 %v129
    %v168 = vpop.f32.mrf.mxu0
    %v169 = vadd.f32 0.0, %v168
    %170 = vmatmul.f32.gmra.mxu0 %v130
    %v171 = vpop.f32.mrf.mxu0
    %v172 = vadd.f32 0.0, %v171
    %173 = vmatmul.f32.gmra.mxu0 %v131
    %v174 = vpop.f32.mrf.mxu0
    %v175 = vadd.f32 0.0, %v174
    %176 = vdwg.mxu0
    %v177 = vld [vmem:[%s2] sm:$0xff]
    %v178 = vld [vmem:[%s2 + $0x8] sm:$0xff]
    %v179 = vadd.f32 %v166, %v177
    %v180 = vadd.f32 %v169, %v178
    %v181 = vadd.f32 %v172, %v177
    %v182 = vadd.f32 %v175, %v178
    %v183 = vmax.f32 %v179, %v180
    %v184 = vrot.slane %v183, 4
    %v185 = vmax.f32 %v183, %v184
    %v186 = vrot.slane %v185, 2
    %v187 = vmax.f32 %v185, %v186
    %v188 = vrot.slane %v187, 1
    %v189 = vmax.f32 %v187, %v188
    %v190 = vmax.f32 %v181, %v182
    %v191 = vrot.slane %v190, 4
    %v192 = vmax.f32 %v190, %v191
    %v193 = vrot.slane %v192, 2
    %v194 = vmax.f32 %v192, %v193
    %v195 = vrot.slane %v194, 1
    %v196 = vmax.f32 %v194, %v195
    %v197 = vmax.f32 %v189, 0.0
    %v198 = vmax.f32 %v196, 0.0
    %v199 = vld [vmem:[#allocation5] sm:$0xff]
    %v200 = vld [vmem:[#allocation5 + $0x8] sm:$0xff]
    %v201 = vld [vmem:[#allocation5 + $0x10] sm:$0xff]
    %v202 = vld [vmem:[#allocation5 + $0x18] sm:$0xff]
    %v203 = vld [vmem:[#allocation5 + $0x20] sm:$0xff]
    %v204 = vld [vmem:[#allocation5 + $0x28] sm:$0xff]
    %v205 = vld [vmem:[#allocation5 + $0x30] sm:$0xff]
    %v206 = vld [vmem:[#allocation5 + $0x38] sm:$0xff]
    %v207 = vld [vmem:[#allocation5 + $0x40] sm:$0xff]
    %v208 = vld [vmem:[#allocation5 + $0x48] sm:$0xff]
    %v209 = vld [vmem:[#allocation5 + $0x50] sm:$0xff]
    %v210 = vld [vmem:[#allocation5 + $0x58] sm:$0xff]
    %v211 = vld [vmem:[#allocation5 + $0x60] sm:$0xff]
    %v212 = vld [vmem:[#allocation5 + $0x68] sm:$0xff]
    %v213 = vld [vmem:[#allocation5 + $0x70] sm:$0xff]
    %v214 = vld [vmem:[#allocation5 + $0x78] sm:$0xff]
    %v215 = vld [vmem:[%s4] sm:$0x1]
    %v217 = vperm.slane %v215, 0
    %vm221 = vcmask 1041409
    %v222 = vsel %vm221, %v198, %v197
    %224 = vmatpush.msra.mxu0 %v214
    %225 = vmatpush.msra.mxu0 %v213
    %226 = vmatpush.msra.mxu0 %v212
    %227 = vmatpush.msra.mxu0 %v211
    %228 = vmatpush.msra.mxu0 %v210
    %229 = vmatpush.msra.mxu0 %v209
    %230 = vmatpush.msra.mxu0 %v208
    %231 = vmatpush.msra.mxu0 %v207
    %232 = vmatpush.msra.mxu0 %v206
    %233 = vmatpush.msra.mxu0 %v205
    %234 = vmatpush.msra.mxu0 %v204
    %235 = vmatpush.msra.mxu0 %v203
    %236 = vmatpush.msra.mxu0 %v202
    %237 = vmatpush.msra.mxu0 %v201
    %238 = vmatpush.msra.mxu0 %v200
    %239 = vmatpush.msra.mxu0 %v199
    %240 = vmatmul.f32.gmra.mxu0 %v222
    %v241 = vpop.f32.mrf.mxu0
    %v242 = vadd.f32 %v217, %v241
    %243 = vdwg.mxu0
    %vm244 = vcmask 1041408
    %v245 = vsel %vm244, %v242, -inf
    %246 = vmax.xlane.f32.xlu0 %v245
    %v247 = vpop.xlane.xlu0 %246
    %v248 = vsub.f32 %v242, %v247
    %v249 = vmul.f32 %v248, 1.442695
    %v250 = vpow.pop %v249
    %v251 = vsel %vm244, %v250, 0.0
    %252 = vadd.xlane.f32.xlu0 %v251
    %v253 = vpop.xlane.xlu0 %252
    %v254 = vlog2.pop %v253
    %v255 = vmul.f32 %v254, 0.6931472
    %v256 = vadd.f32 %v255, %v247
    %v257 = vsub.f32 %v242, %v256
    %258 = vst [vmem:[#allocation7] sm:$0x3] %v257
    // Predicated region
    $region30: #{tpu_custom_call.1} parent=1 // pred_check
      _
    $region31: #{tpu_custom_call.1} parent=1 // pred_check_branch
      %260 = sbr.rel (0) target = $region33
    $region32: #{tpu_custom_call.1} parent=1 // pred_region
      %262 = vsyncadd [#allocation4], 0
      %s264 = sshll.u32 [#allocation7], 4
      %s265 = int_to_ptr.vmem [resolvable:$true] %s264
      %s266 = sshll.u32 %s5, 4
      %s267 = int_to_ptr.hbm [resolvable:$true] %s266
      %269 = dma.vmem_to_hbm [thread:$0]  %s265, 32, %s267, [#allocation4]
    $region33: #{tpu_custom_call.1} parent=1 // pred_fallthru
      _
    // Predicated region
    $region34: #{tpu_custom_call.1} parent=1 // pred_check
      _
    $region35: #{tpu_custom_call.1} parent=1 // pred_check_branch
      %271 = sbr.rel (0) target = $region37
    $region36: #{tpu_custom_call.1} parent=1 // pred_region
      %273 = dma.done [#allocation4], 32
    $region37: #{tpu_custom_call.1} parent=1 // pred_fallthru
      _
    %274 = vsyncpa [#allocation3], 1
    %275 = vsyncpa [#allocation6], 1
    %276 = vsyncpa [#allocation4], 1

</llo_original>
